<compile_context>
chip_gen: v7x
topology: tpu7x:2x2x1
jax: 0.10.0
libtpu: 0.0.40
codegen_flags: <defaults>
</compile_context>

<pallas_src>
import functools

import numpy as np
import jax
import jax.numpy as jnp
from jax import lax
from jax.experimental import pallas as pl
from jax.experimental.pallas import tpu as pltpu

EPS = 1e-6
NEG_LARGE = -1e30            # pushes ignored / padded pixels to the end of the sort
STATS_MAX_BLOCK_ROWS = 256   # (256, 128) f32 block = 128 KiB per input per step
LOVASZ_MAX_CHUNK_ROWS = 64   # (64, 128) chunk = 8192 sorted pixels per grid step


def _round_up(a, b):
    return -(-a // b) * b


# ---------------------------------------------------------------------------
# kernel 1: fused elementwise + reductions for bce / dice / jaccard / focal
# ---------------------------------------------------------------------------
def _make_stats_kernel(total, ignore):
    total = int(total)
    ign = float(ignore)

    def stats_kernel(x_ref, t_ref, out_ref, acc_ref):
        i = pl.program_id(0)

        @pl.when(i == 0)
        def _init():
            acc_ref[...] = jnp.zeros_like(acc_ref)

        x = x_ref[...]                       # (rows, 128) logits
        t = t_ref[...]                       # (rows, 128) targets (0/1 or ignore)
        rows, lanes = x.shape

        r_i = lax.broadcasted_iota(jnp.int32, (rows, lanes), 0)
        l_i = lax.broadcasted_iota(jnp.int32, (rows, lanes), 1)
        pos = i * (rows * lanes) + r_i * lanes + l_i
        real = pos < total                   # mask out the padded tail

        sig = 1.0 / (1.0 + jnp.exp(-x))      # torch.sigmoid(outputs)
        # StableBCELoss: relu(x) - x*t + log(1 + exp(-|x|))
        bce = jnp.maximum(x, 0.0) - x * t + jnp.log(1.0 + jnp.exp(-jnp.abs(x)))
        # FocalLoss2d (gamma = 2): -(1 - pt)^2 * log(pt) on non-ignored pixels
        tc = jnp.clip(t, EPS, 1.0 - EPS)
        sc = jnp.clip(sig, EPS, 1.0 - EPS)
        pt = (1.0 - tc) * (1.0 - sc) + tc * sc
        focal = -((1.0 - pt) * (1.0 - pt)) * jnp.log(pt)
        nonign = jnp.logical_and(real, t != ign)

        zeros = jnp.zeros_like(x)

        def rowsum(v):                       # sublane-only reduction per step
            return jnp.sum(v, axis=0, keepdims=True)

        stacked = jnp.concatenate(
            [rowsum(jnp.where(real, bce, zeros)),                   # 0: sum BCE
             rowsum(jnp.where(real, sig, zeros)),                   # 1: sum sigmoid
             rowsum(jnp.where(real, t, zeros)),                     # 2: sum target
             rowsum(jnp.where(real, sig * t, zeros)),               # 3: sum sig*target
             rowsum(jnp.where(nonign, focal, zeros)),               # 4: sum focal
             rowsum(jnp.where(nonign, jnp.ones_like(x), zeros)),    # 5: # non-ignored
             jnp.zeros((2, lanes), jnp.float32)],
            axis=0)                                                 # (8, 128)
        acc_ref[...] += stacked

        @pl.when(i == pl.num_programs(0) - 1)
        def _fin():
            out_ref[...] = acc_ref[...]

    return stats_kernel


def _combo_stats(outputs, targets, ignore):
    total = int(np.prod(outputs.shape))
    rows = -(-total // 128)
    block_rows = min(STATS_MAX_BLOCK_ROWS, _round_up(rows, 8))
    rows_p = _round_up(rows, block_rows)
    pad = rows_p * 128 - total

    x = jnp.pad(outputs.reshape(-1), (0, pad)).reshape(rows_p, 128)
    t = jnp.pad(targets.reshape(-1), (0, pad)).reshape(rows_p, 128)

    blk = pl.BlockSpec((block_rows, 128), lambda i: (i, 0))
    out = pl.pallas_call(
        _make_stats_kernel(total, ignore),
        out_shape=jax.ShapeDtypeStruct((8, 128), jnp.float32),
        grid=(rows_p // block_rows,),
        in_specs=[blk, blk],
        out_specs=pl.BlockSpec((8, 128), lambda i: (0, 0)),
        scratch_shapes=[pltpu.VMEM((8, 128), jnp.float32)],
        compiler_params=pltpu.CompilerParams(dimension_semantics=("arbitrary",)),
    )(x, t)
    return jnp.sum(out, axis=1)        # (8,): rows 0..5 hold the six sums


# ---------------------------------------------------------------------------
# kernel 2: chunked Lovasz core (shared by hinge and sigmoid variants)
# ---------------------------------------------------------------------------
def _lovasz_chunk_kernel(tri_ref, tril_ref, gts_ref, err_ref, gt_ref, out_ref,
                         acc_ref, carry_ref):
    c = pl.program_id(1)

    @pl.when(c == 0)
    def _init():
        acc_ref[...] = jnp.zeros_like(acc_ref)
        carry_ref[...] = jnp.zeros_like(carry_ref)

    err = err_ref[...]                 # (rows, 128) sorted errors (desc)
    gt = gt_ref[...]                   # (rows, 128) sorted 0/1 labels
    tri = tri_ref[...]                 # (128, 128): tri[i, j] = 1 iff i <= j
    tril = tril_ref[...]               # (rows, rows): tril[r, j] = 1 iff j < r
    gts = gts_ref[...]                 # (1, 1) total positives of this image
    carry = carry_ref[...]             # (1, 1) positives seen in earlier chunks

    rows, lanes = gt.shape

    # blocked inclusive cumsum of gt over the row-major flattened chunk:
    # within-row part on the MXU with the resident 128x128 triangle, cross-row
    # offsets via a small (rows, rows) strictly-lower triangle.
    within = jnp.dot(gt, tri, preferred_element_type=jnp.float32)
    prev_rows = jnp.dot(tril, gt, preferred_element_type=jnp.float32)
    row_off = jnp.sum(prev_rows, axis=1, keepdims=True)
    cum_gt = within + row_off + carry              # global inclusive cumsum

    r_i = lax.broadcasted_iota(jnp.int32, (rows, lanes), 0)
    l_i = lax.broadcasted_iota(jnp.int32, (rows, lanes), 1)
    pos0 = c * (rows * lanes) + r_i * lanes + l_i  # 0-based global position
    pos = (pos0 + 1).astype(jnp.float32)

    # cum_not == pos - cum_gt (labels are 0/1 and pads carry gt = 0, sorted last)
    union = gts + (pos - cum_gt)                               # >= 1
    jac = 1.0 - (gts - cum_gt) / union
    # jaccard of the previous position, computed algebraically -> no lane shifts
    # and no chunk-boundary jac carry.
    cum_prev = cum_gt - gt
    union_prev = gts + (pos - 1.0) - cum_prev
    union_prev = jnp.where(union_prev == 0.0, 1.0, union_prev)
    jac_prev = 1.0 - (gts - cum_prev) / union_prev
    jac_prev = jnp.where(pos0 == 0, 0.0, jac_prev)             # grad[0] = jac[0]
    grad = jac - jac_prev

    # relu(err) zeroes ignored / padded positions (err = NEG_LARGE) exactly;
    # for the sigmoid variant err >= 0 so relu is a no-op on valid pixels.
    acc_ref[...] += jnp.sum(jnp.maximum(err, 0.0) * grad)
    carry_ref[...] = carry + jnp.sum(gt)

    @pl.when(c == pl.num_programs(1) - 1)
    def _fin():
        out_ref[...] = acc_ref[...]


def _lovasz_core(err, gt):
    """err, gt: (Bi, P) f32; invalid positions already have err=NEG_LARGE, gt=0."""
    Bi, P = err.shape
    gts = jnp.sum(gt, axis=1).reshape(Bi, 1, 1)

    rows = -(-P // 128)
    chunk_rows = min(LOVASZ_MAX_CHUNK_ROWS, _round_up(rows, 8))
    rows_p = _round_up(rows, chunk_rows)
    pad = rows_p * 128 - P
    if pad:
        err = jnp.pad(err, ((0, 0), (0, pad)), constant_values=NEG_LARGE)
        gt = jnp.pad(gt, ((0, 0), (0, pad)))

    # Descending sort of errors with the labels carried along (single key-value
    # sort; no argsort + gathers).
    # TODO(synk): the sort itself has no clean Pallas TPU equivalent; XLA sort.
    neg_sorted, gt_sorted = lax.sort_key_val(-err, gt, dimension=1)
    err_sorted = -neg_sorted

    err3 = err_sorted.reshape(Bi, rows_p, 128)
    gt3 = gt_sorted.reshape(Bi, rows_p, 128)

    ar = jnp.arange(128, dtype=jnp.int32)
    tri = (ar[:, None] <= ar[None, :]).astype(jnp.float32)             # (128, 128)
    ac = jnp.arange(chunk_rows, dtype=jnp.int32)
    tril = (ac[None, :] < ac[:, None]).astype(jnp.float32)             # strict lower

    n_chunks = rows_p // chunk_rows
    chunk_spec = pl.BlockSpec((None, chunk_rows, 128), lambda b, c: (b, c, 0))
    losses = pl.pallas_call(
        _lovasz_chunk_kernel,
        out_shape=jax.ShapeDtypeStruct((Bi, 1, 1), jnp.float32),
        grid=(Bi, n_chunks),
        in_specs=[
            pl.BlockSpec((128, 128), lambda b, c: (0, 0)),             # resident tri
            pl.BlockSpec((chunk_rows, chunk_rows), lambda b, c: (0, 0)),
            pl.BlockSpec((None, 1, 1), lambda b, c: (b, 0, 0)),        # per-image gts
            chunk_spec,                                                # sorted errors
            chunk_spec,                                                # sorted labels
        ],
        out_specs=pl.BlockSpec((None, 1, 1), lambda b, c: (b, 0, 0)),
        scratch_shapes=[pltpu.VMEM((1, 1), jnp.float32),               # loss accum
                        pltpu.VMEM((1, 1), jnp.float32)],              # gt prefix carry
        compiler_params=pltpu.CompilerParams(
            dimension_semantics=("parallel", "arbitrary")),
    )(tri, tril, gts, err3, gt3)
    return losses.reshape(Bi)


def _hinge_errors(logits, labels, per_image, ignore):
    Bi = logits.shape[0] if per_image else 1
    lg = logits.reshape(Bi, -1)
    lb = labels.reshape(Bi, -1)
    valid = lb != float(ignore)
    err = jnp.where(valid, 1.0 - lg * (2.0 * lb - 1.0), NEG_LARGE)
    gt = jnp.where(valid, lb, 0.0)
    return err, gt


def _sigmoid_errors(probas, labels, per_image, ignore):
    Bi = probas.shape[0] if per_image else 1
    pr = probas.reshape(Bi, -1)
    lb = labels.reshape(Bi, -1)
    valid = lb != float(ignore)
    err = jnp.where(valid, jnp.abs(lb - pr), NEG_LARGE)
    gt = jnp.where(valid, lb, 0.0)
    return err, gt


# ---------------------------------------------------------------------------
# ComboLoss forward
# ---------------------------------------------------------------------------
def combo_loss(outputs, targets, weights, per_image=False, ignore_index=255):
    """Forward pass of ComboLoss(weights, per_image). Returns (loss, per-term dict)."""
    outputs = jnp.asarray(outputs, jnp.float32)
    targets = jnp.asarray(targets, jnp.float32)
    total = int(np.prod(outputs.shape))

    values = {}
    if any(weights.get(k, 0) for k in ("bce", "dice", "jaccard", "focal")):
        s = _combo_stats(outputs, targets, ignore_index)
        s_bce, s_sig, s_tgt, s_st, s_foc, n_val = (s[i] for i in range(6))
        values["bce"] = s_bce / total
        values["dice"] = 1.0 - (2.0 * s_st + EPS) / (s_sig + s_tgt + EPS)
        values["jaccard"] = 1.0 - (s_st + EPS) / (s_sig + s_tgt - s_st + EPS)
        values["focal"] = s_foc / n_val

    need_h = bool(weights.get("lovasz", 0))
    need_s = bool(weights.get("lovasz_sigmoid", 0))
    if need_h or need_s:
        errs, gts = [], []
        if need_h:
            e, g = _hinge_errors(outputs, targets, per_image, ignore_index)
            errs.append(e)
            gts.append(g)
        if need_s:
            sig = 1.0 / (1.0 + jnp.exp(-outputs))
            e, g = _sigmoid_errors(sig, targets, per_image, ignore_index)
            errs.append(e)
            gts.append(g)
        # both Lovasz variants share one sort and one pallas_call (batch-stacked)
        losses = _lovasz_core(jnp.concatenate(errs, axis=0),
                              jnp.concatenate(gts, axis=0))
        Bi = errs[0].shape[0]
        idx = 0
        if need_h:
            values["lovasz"] = jnp.mean(losses[idx * Bi:(idx + 1) * Bi])
            idx += 1
        if need_s:
            values["lovasz_sigmoid"] = jnp.mean(losses[idx * Bi:(idx + 1) * Bi])

    loss = jnp.float32(0.0)
    for k, w in weights.items():
        if w:
            loss = loss + w * values[k]
    return loss, values


# ---------------------------------------------------------------------------
# pure-numpy reference (mirrors the PyTorch module, float64)
# ---------------------------------------------------------------------------
def _ref_combo(outputs, targets, weights, per_image, ignore=255):
    x = np.asarray(outputs, np.float64)
    t = np.asarray(targets, np.float64)
    sig = 1.0 / (1.0 + np.exp(-x))
    xf, tf, of = x.reshape(-1), t.reshape(-1), sig.reshape(-1)

    vals = {}
    vals["bce"] = float(np.mean(np.maximum(xf, 0.0) - xf * tf
                                + np.log1p(np.exp(-np.abs(xf)))))
    inter = float(np.sum(of * tf)); so = float(np.sum(of)); st = float(np.sum(tf))
    vals["dice"] = 1.0 - (2.0 * inter + EPS) / (so + st + EPS)
    vals["jaccard"] = 1.0 - (inter + EPS) / (so + st - inter + EPS)
    m = tf != ignore
    tc = np.clip(tf[m], EPS, 1.0 - EPS); oc = np.clip(of[m], EPS, 1.0 - EPS)
    pt = (1.0 - tc) * (1.0 - oc) + tc * oc
    vals["focal"] = float(np.mean(-((1.0 - pt) ** 2) * np.log(pt)))

    def lovasz_grad(gs):
        gts = gs.sum()
        inter_ = gts - np.cumsum(gs)
        union_ = gts + np.cumsum(1.0 - gs)
        jac = 1.0 - inter_ / union_
        if len(gs) > 1:
            jac[1:] = jac[1:] - jac[:-1]
        return jac

    def hinge_flat(lg, lb):
        if lg.size == 0:
            return 0.0
        errs = 1.0 - lg * (2.0 * lb - 1.0)
        order = np.argsort(-errs, kind="stable")
        return float(np.dot(np.maximum(errs[order], 0.0), lovasz_grad(lb[order])))

    def sigm_flat(pr, lb):
        if pr.size == 0:
            return 0.0
        errs = np.abs(lb - pr)
        order = np.argsort(-errs, kind="stable")
        return float(np.dot(errs[order], lovasz_grad(lb[order])))

    if per_image:
        lh, ls = [], []
        for b in range(x.shape[0]):
            lg, pr, lb = x[b].reshape(-1), sig[b].reshape(-1), t[b].reshape(-1)
            v = lb != ignore
            lh.append(hinge_flat(lg[v], lb[v]))
            ls.append(sigm_flat(pr[v], lb[v]))
        vals["lovasz"] = float(np.mean(lh))
        vals["lovasz_sigmoid"] = float(np.mean(ls))
    else:
        v = tf != ignore
        vals["lovasz"] = hinge_flat(xf[v], tf[v])
        vals["lovasz_sigmoid"] = sigm_flat(of[v], tf[v])

    total = sum(w * vals[k] for k, w in weights.items() if w)
    return total, vals


if __name__ == "__main__":
    key = jax.random.PRNGKey(0)
    k1, k2, k3 = jax.random.split(key, 3)

    B, H, W = 2, 16, 16
    weights = {"bce": 1.0, "dice": 0.5, "focal": 0.3,
               "jaccard": 0.4, "lovasz": 0.75, "lovasz_sigmoid": 0.6}

    outputs = jax.random.normal(k1, (B, H, W), jnp.float32) * 2.0
    labels01 = jax.random.bernoulli(k2, 0.5, (B, H, W)).astype(jnp.float32)
    ignore_mask = jax.random.bernoulli(k3, 0.1, (B, H, W))
    targets = jnp.where(ignore_mask, 255.0, labels01)

    for per_image in (True, False):
        combo = jax.jit(functools.partial(combo_loss, weights=weights,
                                          per_image=per_image))
        loss, values = combo(outputs, targets)
        loss = jax.block_until_ready(loss)

        ref_total, ref_vals = _ref_combo(np.asarray(outputs), np.asarray(targets),
                                         weights, per_image)
        for k in weights:
            got, want = float(values[k]), ref_vals[k]
            assert abs(got - want) <= 2e-3 * max(1.0, abs(want)), \
                (per_image, k, got, want)
        assert abs(float(loss) - ref_total) <= 2e-3 * max(1.0, abs(ref_total)), \
            (per_image, float(loss), ref_total)
    print("KERNEL_OK")
</pallas_src>

<mosaic_0001>
module attributes {stable_mosaic.version = 11 : i64} {
  func.func @stats_kernel(%arg0: i32, %arg1: memref<8x128xf32, #tpu.memory_space<vmem>>, %arg2: memref<8x128xf32, #tpu.memory_space<vmem>>, %arg3: memref<8x128xf32, #tpu.memory_space<vmem>>, %arg4: memref<8x128xf32, #tpu.memory_space<vmem>>) attributes {dimension_semantics = [#tpu.dimension_semantics<arbitrary>], iteration_bounds = array<i64: 1>, scalar_prefetch = 0 : i64, scratch_operands = 1 : i64, tpu.core_type = #tpu.core_type<tc>, window_params = [{transform_indices = @transform_0, window_bounds = array<i64: 8, 128>}, {transform_indices = @transform_1, window_bounds = array<i64: 8, 128>}, {pipeline_mode = #tpu.pipeline_mode<synchronous>, transform_indices = @transform_2, window_bounds = array<i64: 8, 128>}]} {
    %c0_i32 = arith.constant 0 : i32
    %0 = arith.cmpi eq, %arg0, %c0_i32 : i32
    %1 = arith.extui %0 : i1 to i32
    %c0_i32_0 = arith.constant 0 : i32
    %2 = arith.cmpi ne, %1, %c0_i32_0 : i32
    scf.if %2 {
      %cst_34 = arith.constant 0.000000e+00 : f32
      %90 = vector.broadcast %cst_34 : f32 to vector<8x128xf32>
      %c0_35 = arith.constant 0 : index
      %c0_36 = arith.constant 0 : index
      %91 = vector.load %arg4[%c0_35, %c0_36] : memref<8x128xf32, #tpu.memory_space<vmem>>, vector<8x128xf32>
      tpu.vector_store %arg4[%c0_35, %c0_36], %90 {strides = array<i32>} : memref<8x128xf32, #tpu.memory_space<vmem>>, vector<8x128xf32>,
    } else {
    }
    %c0 = arith.constant 0 : index
    %c0_1 = arith.constant 0 : index
    %3 = vector.load %arg1[%c0, %c0_1] : memref<8x128xf32, #tpu.memory_space<vmem>>, vector<8x128xf32>
    %c0_2 = arith.constant 0 : index
    %c0_3 = arith.constant 0 : index
    %4 = vector.load %arg2[%c0_2, %c0_3] : memref<8x128xf32, #tpu.memory_space<vmem>>, vector<8x128xf32>
    %5 = tpu.iota {dimensions = array<i32: 0>} : vector<8x128xi32>
    %6 = tpu.iota {dimensions = array<i32: 1>} : vector<8x128xi32>
    %c1024_i32 = arith.constant 1024 : i32
    %7 = arith.muli %arg0, %c1024_i32 : i32
    %c128_i32 = arith.constant 128 : i32
    %8 = vector.broadcast %c128_i32 : i32 to vector<8x128xi32>
    %9 = arith.muli %5, %8 : vector<8x128xi32>
    %10 = vector.broadcast %7 : i32 to vector<8x128xi32>
    %11 = arith.addi %10, %9 : vector<8x128xi32>
    %12 = arith.addi %11, %6 : vector<8x128xi32>
    %c512_i32 = arith.constant 512 : i32
    %13 = vector.broadcast %c512_i32 : i32 to vector<8x128xi32>
    %14 = arith.cmpi slt, %12, %13 : vector<8x128xi32>
    %cst = arith.constant 0.000000e+00 : f32
    %15 = vector.broadcast %cst : f32 to vector<8x128xf32>
    %16 = arith.subf %15, %3 : vector<8x128xf32>
    %17 = math.exp %16 : vector<8x128xf32>
    %cst_4 = arith.constant 1.000000e+00 : f32
    %18 = vector.broadcast %cst_4 : f32 to vector<8x128xf32>
    %19 = arith.addf %18, %17 : vector<8x128xf32>
    %cst_5 = arith.constant 1.000000e+00 : f32
    %20 = vector.broadcast %cst_5 : f32 to vector<8x128xf32>
    %21 = arith.divf %20, %19 : vector<8x128xf32>
    %cst_6 = arith.constant 0.000000e+00 : f32
    %22 = vector.broadcast %cst_6 : f32 to vector<8x128xf32>
    %23 = arith.maximumf %3, %22 : vector<8x128xf32>
    %24 = arith.mulf %3, %4 : vector<8x128xf32>
    %25 = arith.subf %23, %24 : vector<8x128xf32>
    %26 = math.absf %3 : vector<8x128xf32>
    %cst_7 = arith.constant 0.000000e+00 : f32
    %27 = vector.broadcast %cst_7 : f32 to vector<8x128xf32>
    %28 = arith.subf %27, %26 : vector<8x128xf32>
    %29 = math.exp %28 : vector<8x128xf32>
    %cst_8 = arith.constant 1.000000e+00 : f32
    %30 = vector.broadcast %cst_8 : f32 to vector<8x128xf32>
    %31 = arith.addf %30, %29 : vector<8x128xf32>
    %32 = math.log %31 : vector<8x128xf32>
    %33 = arith.addf %25, %32 : vector<8x128xf32>
    %cst_9 = arith.constant 9.99999997E-7 : f32
    %cst_10 = arith.constant 0.999998986 : f32
    %34 = vector.broadcast %cst_9 : f32 to vector<8x128xf32>
    %35 = arith.maximumf %34, %4 : vector<8x128xf32>
    %36 = vector.broadcast %cst_10 : f32 to vector<8x128xf32>
    %37 = arith.minimumf %36, %35 : vector<8x128xf32>
    %cst_11 = arith.constant 9.99999997E-7 : f32
    %cst_12 = arith.constant 0.999998986 : f32
    %38 = vector.broadcast %cst_11 : f32 to vector<8x128xf32>
    %39 = arith.maximumf %38, %21 : vector<8x128xf32>
    %40 = vector.broadcast %cst_12 : f32 to vector<8x128xf32>
    %41 = arith.minimumf %40, %39 : vector<8x128xf32>
    %cst_13 = arith.constant 1.000000e+00 : f32
    %42 = vector.broadcast %cst_13 : f32 to vector<8x128xf32>
    %43 = arith.subf %42, %37 : vector<8x128xf32>
    %cst_14 = arith.constant 1.000000e+00 : f32
    %44 = vector.broadcast %cst_14 : f32 to vector<8x128xf32>
    %45 = arith.subf %44, %41 : vector<8x128xf32>
    %46 = arith.mulf %43, %45 : vector<8x128xf32>
    %47 = arith.mulf %37, %41 : vector<8x128xf32>
    %48 = arith.addf %46, %47 : vector<8x128xf32>
    %cst_15 = arith.constant 1.000000e+00 : f32
    %49 = vector.broadcast %cst_15 : f32 to vector<8x128xf32>
    %50 = arith.subf %49, %48 : vector<8x128xf32>
    %cst_16 = arith.constant 1.000000e+00 : f32
    %51 = vector.broadcast %cst_16 : f32 to vector<8x128xf32>
    %52 = arith.subf %51, %48 : vector<8x128xf32>
    %53 = arith.mulf %50, %52 : vector<8x128xf32>
    %cst_17 = arith.constant 0.000000e+00 : f32
    %54 = vector.broadcast %cst_17 : f32 to vector<8x128xf32>
    %55 = arith.subf %54, %53 : vector<8x128xf32>
    %56 = math.log %48 : vector<8x128xf32>
    %57 = arith.mulf %55, %56 : vector<8x128xf32>
    %cst_18 = arith.constant 2.550000e+02 : f32
    %58 = vector.broadcast %cst_18 : f32 to vector<8x128xf32>
    %59 = arith.cmpf one, %4, %58 : vector<8x128xf32>
    %60 = arith.andi %14, %59 : vector<8x128xi1>
    %cst_19 = arith.constant 0.000000e+00 : f32
    %61 = vector.broadcast %cst_19 : f32 to vector<8x128xf32>
    %62 = arith.select %14, %33, %61 : vector<8x128xi1>, vector<8x128xf32>
    %cst_20 = arith.constant dense<0.000000e+00> : vector<128xf32>
    %63 = vector.multi_reduction <add>, %62, %cst_20 [0] : vector<8x128xf32> to vector<128xf32>
    %64 = vector.shape_cast %63 : vector<128xf32> to vector<1x128xf32>
    %65 = arith.select %14, %21, %61 : vector<8x128xi1>, vector<8x128xf32>
    %cst_21 = arith.constant dense<0.000000e+00> : vector<128xf32>
    %66 = vector.multi_reduction <add>, %65, %cst_21 [0] : vector<8x128xf32> to vector<128xf32>
    %67 = vector.shape_cast %66 : vector<128xf32> to vector<1x128xf32>
    %68 = arith.select %14, %4, %61 : vector<8x128xi1>, vector<8x128xf32>
    %cst_22 = arith.constant dense<0.000000e+00> : vector<128xf32>
    %69 = vector.multi_reduction <add>, %68, %cst_22 [0] : vector<8x128xf32> to vector<128xf32>
    %70 = vector.shape_cast %69 : vector<128xf32> to vector<1x128xf32>
    %71 = arith.mulf %21, %4 : vector<8x128xf32>
    %72 = arith.select %14, %71, %61 : vector<8x128xi1>, vector<8x128xf32>
    %cst_23 = arith.constant dense<0.000000e+00> : vector<128xf32>
    %73 = vector.multi_reduction <add>, %72, %cst_23 [0] : vector<8x128xf32> to vector<128xf32>
    %74 = vector.shape_cast %73 : vector<128xf32> to vector<1x128xf32>
    %75 = arith.select %60, %57, %61 : vector<8x128xi1>, vector<8x128xf32>
    %cst_24 = arith.constant dense<0.000000e+00> : vector<128xf32>
    %76 = vector.multi_reduction <add>, %75, %cst_24 [0] : vector<8x128xf32> to vector<128xf32>
    %77 = vector.shape_cast %76 : vector<128xf32> to vector<1x128xf32>
    %cst_25 = arith.constant 1.000000e+00 : f32
    %78 = vector.broadcast %cst_25 : f32 to vector<8x128xf32>
    %79 = arith.select %60, %78, %61 : vector<8x128xi1>, vector<8x128xf32>
    %cst_26 = arith.constant dense<0.000000e+00> : vector<128xf32>
    %80 = vector.multi_reduction <add>, %79, %cst_26 [0] : vector<8x128xf32> to vector<128xf32>
    %81 = vector.shape_cast %80 : vector<128xf32> to vector<1x128xf32>
    %cst_27 = arith.constant 0.000000e+00 : f32
    %82 = vector.broadcast %cst_27 : f32 to vector<2x128xf32>
    %83 = tpu.concatenate %64, %67, %70, %74, %77, %81, %82 in 0 : vector<1x128xf32>, vector<1x128xf32>, vector<1x128xf32>, vector<1x128xf32>, vector<1x128xf32>, vector<1x128xf32>, vector<2x128xf32> -> vector<8x128xf32>
    %c0_28 = arith.constant 0 : index
    %c0_29 = arith.constant 0 : index
    %84 = vector.load %arg4[%c0_28, %c0_29] : memref<8x128xf32, #tpu.memory_space<vmem>>, vector<8x128xf32>
    %85 = arith.addf %84, %83 : vector<8x128xf32>
    %c0_30 = arith.constant 0 : index
    %c0_31 = arith.constant 0 : index
    %86 = vector.load %arg4[%c0_30, %c0_31] : memref<8x128xf32, #tpu.memory_space<vmem>>, vector<8x128xf32>
    tpu.vector_store %arg4[%c0_30, %c0_31], %85 {strides = array<i32>} : memref<8x128xf32, #tpu.memory_space<vmem>>, vector<8x128xf32>,
    %c0_i32_32 = arith.constant 0 : i32
    %87 = arith.cmpi eq, %arg0, %c0_i32_32 : i32
    %88 = arith.extui %87 : i1 to i32
    %c0_i32_33 = arith.constant 0 : i32
    %89 = arith.cmpi ne, %88, %c0_i32_33 : i32
    scf.if %89 {
      %c0_34 = arith.constant 0 : index
      %c0_35 = arith.constant 0 : index
      %90 = vector.load %arg4[%c0_34, %c0_35] : memref<8x128xf32, #tpu.memory_space<vmem>>, vector<8x128xf32>
      %c0_36 = arith.constant 0 : index
      %c0_37 = arith.constant 0 : index
      %91 = vector.load %arg3[%c0_36, %c0_37] : memref<8x128xf32, #tpu.memory_space<vmem>>, vector<8x128xf32>
      tpu.vector_store %arg3[%c0_36, %c0_37], %90 {strides = array<i32>} : memref<8x128xf32, #tpu.memory_space<vmem>>, vector<8x128xf32>,
    } else {
    }
    return
  }
  func.func @transform_0(%arg0: i32) -> (i32, i32) {
    %c0_i32 = arith.constant 0 : i32
    %c0_i32_0 = arith.constant 0 : i32
    return %arg0, %c0_i32 : i32, i32
  }
  func.func @transform_1(%arg0: i32) -> (i32, i32) {
    %c0_i32 = arith.constant 0 : i32
    %c0_i32_0 = arith.constant 0 : i32
    return %arg0, %c0_i32 : i32, i32
  }
  func.func @transform_2(%arg0: i32) -> (i32, i32) {
    %c0_i32 = arith.constant 0 : i32
    %c0_i32_0 = arith.constant 0 : i32
    %c0_i32_1 = arith.constant 0 : i32
    return %c0_i32, %c0_i32_0 : i32, i32
  }
}

module attributes {stable_mosaic.version = 11 : i64} {
  func.func @_lovasz_chunk_kernel(%arg0: i32, %arg1: i32, %arg2: memref<128x128xf32, #tpu.memory_space<vmem>>, %arg3: memref<8x8xf32, #tpu.memory_space<vmem>>, %arg4: memref<1x1x1xf32, #tpu.memory_space<vmem>>, %arg5: memref<1x8x128xf32, #tpu.memory_space<vmem>>, %arg6: memref<1x8x128xf32, #tpu.memory_space<vmem>>, %arg7: memref<1x1x1xf32, #tpu.memory_space<vmem>>, %arg8: memref<1x1xf32, #tpu.memory_space<vmem>>, %arg9: memref<1x1xf32, #tpu.memory_space<vmem>>) attributes {dimension_semantics = [#tpu.dimension_semantics<parallel>, #tpu.dimension_semantics<arbitrary>], iteration_bounds = array<i64: 4, 1>, scalar_prefetch = 0 : i64, scratch_operands = 2 : i64, tpu.core_type = #tpu.core_type<tc>, window_params = [{pipeline_mode = #tpu.pipeline_mode<synchronous>, transform_indices = @transform_0, window_bounds = array<i64: 128, 128>}, {pipeline_mode = #tpu.pipeline_mode<synchronous>, transform_indices = @transform_1, window_bounds = array<i64: 8, 8>}, {transform_indices = @transform_2, window_bounds = array<i64: 1, 1, 1>}, {transform_indices = @transform_3, window_bounds = array<i64: 1, 8, 128>}, {transform_indices = @transform_4, window_bounds = array<i64: 1, 8, 128>}, {transform_indices = @transform_5, window_bounds = array<i64: 1, 1, 1>}]} {
    %c0_i32 = arith.constant 0 : i32
    %0 = arith.cmpi eq, %arg1, %c0_i32 : i32
    %1 = arith.extui %0 : i1 to i32
    %c0_i32_0 = arith.constant 0 : i32
    %2 = arith.cmpi ne, %1, %c0_i32_0 : i32
    scf.if %2 {
      %cst_35 = arith.constant 0.000000e+00 : f32
      %80 = vector.broadcast %cst_35 : f32 to vector<1x1xf32>
      %c0_36 = arith.constant 0 : index
      %c0_37 = arith.constant 0 : index
      %81 = vector.load %arg8[%c0_36, %c0_37] : memref<1x1xf32, #tpu.memory_space<vmem>>, vector<1x1xf32>
      tpu.vector_store %arg8[%c0_36, %c0_37], %80 {strides = array<i32>} : memref<1x1xf32, #tpu.memory_space<vmem>>, vector<1x1xf32>,
      %cst_38 = arith.constant 0.000000e+00 : f32
      %82 = vector.broadcast %cst_38 : f32 to vector<1x1xf32>
      %c0_39 = arith.constant 0 : index
      %c0_40 = arith.constant 0 : index
      %83 = vector.load %arg9[%c0_39, %c0_40] : memref<1x1xf32, #tpu.memory_space<vmem>>, vector<1x1xf32>
      tpu.vector_store %arg9[%c0_39, %c0_40], %82 {strides = array<i32>} : memref<1x1xf32, #tpu.memory_space<vmem>>, vector<1x1xf32>,
    } else {
    }
    %c0 = arith.constant 0 : index
    %c0_1 = arith.constant 0 : index
    %c0_2 = arith.constant 0 : index
    %3 = vector.load %arg5[%c0, %c0_1, %c0_2] : memref<1x8x128xf32, #tpu.memory_space<vmem>>, vector<1x8x128xf32>
    %4 = vector.shape_cast %3 : vector<1x8x128xf32> to vector<8x128xf32>
    %c0_3 = arith.constant 0 : index
    %c0_4 = arith.constant 0 : index
    %c0_5 = arith.constant 0 : index
    %5 = vector.load %arg6[%c0_3, %c0_4, %c0_5] : memref<1x8x128xf32, #tpu.memory_space<vmem>>, vector<1x8x128xf32>
    %6 = vector.shape_cast %5 : vector<1x8x128xf32> to vector<8x128xf32>
    %c0_6 = arith.constant 0 : index
    %c0_7 = arith.constant 0 : index
    %7 = vector.load %arg2[%c0_6, %c0_7] : memref<128x128xf32, #tpu.memory_space<vmem>>, vector<128x128xf32>
    %c0_8 = arith.constant 0 : index
    %c0_9 = arith.constant 0 : index
    %8 = vector.load %arg3[%c0_8, %c0_9] : memref<8x8xf32, #tpu.memory_space<vmem>>, vector<8x8xf32>
    %c0_10 = arith.constant 0 : index
    %c0_11 = arith.constant 0 : index
    %c0_12 = arith.constant 0 : index
    %9 = vector.load %arg4[%c0_10, %c0_11, %c0_12] : memref<1x1x1xf32, #tpu.memory_space<vmem>>, vector<1x1x1xf32>
    %10 = vector.shape_cast %9 : vector<1x1x1xf32> to vector<1x1xf32>
    %c0_13 = arith.constant 0 : index
    %c0_14 = arith.constant 0 : index
    %11 = vector.load %arg9[%c0_13, %c0_14] : memref<1x1xf32, #tpu.memory_space<vmem>>, vector<1x1xf32>
    %cst = arith.constant dense<0.000000e+00> : vector<8x128xf32>
    %12 = tpu.matmul %6, %7, %cst {dimension_numbers = #tpu.dot_dimension_numbers<[1], [0], [0], [1], [0, 0, 1, 1], [], []>} : vector<8x128xf32>, vector<128x128xf32>, vector<8x128xf32> -> vector<8x128xf32>
    %cst_15 = arith.constant dense<0.000000e+00> : vector<8x128xf32>
    %13 = tpu.matmul %8, %6, %cst_15 {dimension_numbers = #tpu.dot_dimension_numbers<[1], [0], [0], [1], [0, 0, 1, 1], [], []>} : vector<8x8xf32>, vector<8x128xf32>, vector<8x128xf32> -> vector<8x128xf32>
    %cst_16 = arith.constant dense<0.000000e+00> : vector<8xf32>
    %14 = vector.multi_reduction <add>, %13, %cst_16 [1] : vector<8x128xf32> to vector<8xf32>
    %15 = vector.shape_cast %14 : vector<8xf32> to vector<8x1xf32>
    %16 = vector.broadcast %15 : vector<8x1xf32> to vector<8x128xf32>
    %17 = arith.addf %12, %16 : vector<8x128xf32>
    %18 = vector.broadcast %11 : vector<1x1xf32> to vector<8x128xf32>
    %19 = arith.addf %17, %18 : vector<8x128xf32>
    %20 = tpu.iota {dimensions = array<i32: 0>} : vector<8x128xi32>
    %21 = tpu.iota {dimensions = array<i32: 1>} : vector<8x128xi32>
    %c1024_i32 = arith.constant 1024 : i32
    %22 = arith.muli %arg1, %c1024_i32 : i32
    %c128_i32 = arith.constant 128 : i32
    %23 = vector.broadcast %c128_i32 : i32 to vector<8x128xi32>
    %24 = arith.muli %20, %23 : vector<8x128xi32>
    %25 = vector.broadcast %22 : i32 to vector<8x128xi32>
    %26 = arith.addi %25, %24 : vector<8x128xi32>
    %27 = arith.addi %26, %21 : vector<8x128xi32>
    %c1_i32 = arith.constant 1 : i32
    %28 = vector.broadcast %c1_i32 : i32 to vector<8x128xi32>
    %29 = arith.addi %27, %28 : vector<8x128xi32>
    %30 = arith.sitofp %29 : vector<8x128xi32> to vector<8x128xf32>
    %31 = arith.subf %30, %19 : vector<8x128xf32>
    %32 = vector.broadcast %10 : vector<1x1xf32> to vector<8x128xf32>
    %33 = arith.addf %32, %31 : vector<8x128xf32>
    %34 = vector.broadcast %10 : vector<1x1xf32> to vector<8x128xf32>
    %35 = arith.subf %34, %19 : vector<8x128xf32>
    %36 = arith.divf %35, %33 : vector<8x128xf32>
    %cst_17 = arith.constant 1.000000e+00 : f32
    %37 = vector.broadcast %cst_17 : f32 to vector<8x128xf32>
    %38 = arith.subf %37, %36 : vector<8x128xf32>
    %39 = arith.subf %19, %6 : vector<8x128xf32>
    %cst_18 = arith.constant 1.000000e+00 : f32
    %40 = vector.broadcast %cst_18 : f32 to vector<8x128xf32>
    %41 = arith.subf %30, %40 : vector<8x128xf32>
    %42 = vector.broadcast %10 : vector<1x1xf32> to vector<8x128xf32>
    %43 = arith.addf %42, %41 : vector<8x128xf32>
    %44 = arith.subf %43, %39 : vector<8x128xf32>
    %cst_19 = arith.constant 0.000000e+00 : f32
    %45 = vector.broadcast %cst_19 : f32 to vector<8x128xf32>
    %46 = arith.cmpf oeq, %44, %45 : vector<8x128xf32>
    %cst_20 = arith.constant 1.000000e+00 : f32
    %47 = vector.broadcast %cst_20 : f32 to vector<8x128xf32>
    %48 = arith.select %46, %47, %44 : vector<8x128xi1>, vector<8x128xf32>
    %49 = vector.broadcast %10 : vector<1x1xf32> to vector<8x128xf32>
    %50 = arith.subf %49, %39 : vector<8x128xf32>
    %51 = arith.divf %50, %48 : vector<8x128xf32>
    %cst_21 = arith.constant 1.000000e+00 : f32
    %52 = vector.broadcast %cst_21 : f32 to vector<8x128xf32>
    %53 = arith.subf %52, %51 : vector<8x128xf32>
    %c0_i32_22 = arith.constant 0 : i32
    %54 = vector.broadcast %c0_i32_22 : i32 to vector<8x128xi32>
    %55 = arith.cmpi eq, %27, %54 : vector<8x128xi32>
    %cst_23 = arith.constant 0.000000e+00 : f32
    %56 = vector.broadcast %cst_23 : f32 to vector<8x128xf32>
    %57 = arith.select %55, %56, %53 : vector<8x128xi1>, vector<8x128xf32>
    %58 = arith.subf %38, %57 : vector<8x128xf32>
    %c0_24 = arith.constant 0 : index
    %c0_25 = arith.constant 0 : index
    %59 = vector.load %arg8[%c0_24, %c0_25] : memref<1x1xf32, #tpu.memory_space<vmem>>, vector<1x1xf32>
    %cst_26 = arith.constant 0.000000e+00 : f32
    %60 = vector.broadcast %cst_26 : f32 to vector<8x128xf32>
    %61 = arith.maximumf %4, %60 : vector<8x128xf32>
    %62 = arith.mulf %61, %58 : vector<8x128xf32>
    %63 = vector.shape_cast %62 : vector<8x128xf32> to vector<1x8x128xf32>
    %cst_27 = arith.constant dense<0.000000e+00> : vector<1xf32>
    %64 = vector.multi_reduction <add>, %63, %cst_27 [1, 2] : vector<1x8x128xf32> to vector<1xf32>
    %65 = vector.shape_cast %64 : vector<1xf32> to vector<1x1x1xf32>
    %66 = vector.extract %65[0, 0, 0] : f32 from vector<1x1x1xf32>
    %67 = vector.broadcast %66 : f32 to vector<1x1xf32>
    %68 = arith.addf %59, %67 : vector<1x1xf32>
    %c0_28 = arith.constant 0 : index
    %c0_29 = arith.constant 0 : index
    %69 = vector.load %arg8[%c0_28, %c0_29] : memref<1x1xf32, #tpu.memory_space<vmem>>, vector<1x1xf32>
    tpu.vector_store %arg8[%c0_28, %c0_29], %68 {strides = array<i32>} : memref<1x1xf32, #tpu.memory_space<vmem>>, vector<1x1xf32>,
    %70 = vector.shape_cast %6 : vector<8x128xf32> to vector<1x8x128xf32>
    %cst_30 = arith.constant dense<0.000000e+00> : vector<1xf32>
    %71 = vector.multi_reduction <add>, %70, %cst_30 [1, 2] : vector<1x8x128xf32> to vector<1xf32>
    %72 = vector.shape_cast %71 : vector<1xf32> to vector<1x1x1xf32>
    %73 = vector.extract %72[0, 0, 0] : f32 from vector<1x1x1xf32>
    %74 = vector.broadcast %73 : f32 to vector<1x1xf32>
    %75 = arith.addf %11, %74 : vector<1x1xf32>
    %c0_31 = arith.constant 0 : index
    %c0_32 = arith.constant 0 : index
    %76 = vector.load %arg9[%c0_31, %c0_32] : memref<1x1xf32, #tpu.memory_space<vmem>>, vector<1x1xf32>
    tpu.vector_store %arg9[%c0_31, %c0_32], %75 {strides = array<i32>} : memref<1x1xf32, #tpu.memory_space<vmem>>, vector<1x1xf32>,
    %c0_i32_33 = arith.constant 0 : i32
    %77 = arith.cmpi eq, %arg1, %c0_i32_33 : i32
    %78 = arith.extui %77 : i1 to i32
    %c0_i32_34 = arith.constant 0 : i32
    %79 = arith.cmpi ne, %78, %c0_i32_34 : i32
    scf.if %79 {
      %c0_35 = arith.constant 0 : index
      %c0_36 = arith.constant 0 : index
      %80 = vector.load %arg8[%c0_35, %c0_36] : memref<1x1xf32, #tpu.memory_space<vmem>>, vector<1x1xf32>
      %c0_37 = arith.constant 0 : index
      %c0_38 = arith.constant 0 : index
      %c0_39 = arith.constant 0 : index
      %81 = vector.load %arg7[%c0_37, %c0_38, %c0_39] : memref<1x1x1xf32, #tpu.memory_space<vmem>>, vector<1x1x1xf32>
      %82 = vector.shape_cast %81 : vector<1x1x1xf32> to vector<1x1xf32>
      %83 = vector.shape_cast %80 : vector<1x1xf32> to vector<1x1x1xf32>
      tpu.vector_store %arg7[%c0_37, %c0_38, %c0_39], %83 {strides = array<i32>} : memref<1x1x1xf32, #tpu.memory_space<vmem>>, vector<1x1x1xf32>,
    } else {
    }
    return
  }
  func.func @transform_0(%arg0: i32, %arg1: i32) -> (i32, i32) {
    %c0_i32 = arith.constant 0 : i32
    %c0_i32_0 = arith.constant 0 : i32
    %c0_i32_1 = arith.constant 0 : i32
    return %c0_i32, %c0_i32_0 : i32, i32
  }
  func.func @transform_1(%arg0: i32, %arg1: i32) -> (i32, i32) {
    %c0_i32 = arith.constant 0 : i32
    %c0_i32_0 = arith.constant 0 : i32
    %c0_i32_1 = arith.constant 0 : i32
    return %c0_i32, %c0_i32_0 : i32, i32
  }
  func.func @transform_2(%arg0: i32, %arg1: i32) -> (i32, i32, i32) {
    %c0_i32 = arith.constant 0 : i32
    %c0_i32_0 = arith.constant 0 : i32
    %c0_i32_1 = arith.constant 0 : i32
    return %arg0, %c0_i32, %c0_i32_0 : i32, i32, i32
  }
  func.func @transform_3(%arg0: i32, %arg1: i32) -> (i32, i32, i32) {
    %c0_i32 = arith.constant 0 : i32
    %c0_i32_0 = arith.constant 0 : i32
    return %arg0, %arg1, %c0_i32 : i32, i32, i32
  }
  func.func @transform_4(%arg0: i32, %arg1: i32) -> (i32, i32, i32) {
    %c0_i32 = arith.constant 0 : i32
    %c0_i32_0 = arith.constant 0 : i32
    return %arg0, %arg1, %c0_i32 : i32, i32, i32
  }
  func.func @transform_5(%arg0: i32, %arg1: i32) -> (i32, i32, i32) {
    %c0_i32 = arith.constant 0 : i32
    %c0_i32_0 = arith.constant 0 : i32
    %c0_i32_1 = arith.constant 0 : i32
    return %arg0, %c0_i32, %c0_i32_0 : i32, i32, i32
  }
}

</mosaic_0001>

<llo_original>
// kernel: combo_loss.2
$region0: #{combo_loss.2}
  #allocation0 [shape = 'u32[]', space=smem, size = 0x4, offset = 0x4, fixed_abs, tag = 'smem constant byte address 0x4 - core index']
  #allocation1 [shape = 'u32[144,128]{1,0:T(1,128)}', space=vmem, size = 0x12000, scoped, tag = 'internal scratch']
  #allocation2 [shape = 'f32[8,128]{1,0:T(8,128)}', space=vmem, size = 0x1000, scoped, tag = 'scratch operand']
  %s0 = inlined_call_operand.vmem [shape: f32[8,128], index: 0, kind: input, shape index: {}]
  %s1 = inlined_call_operand.vmem [shape: f32[8,128], index: 1, kind: input, shape index: {}]
  %s2 = inlined_call_operand.vmem [shape: f32[8,128], index: 2, kind: output, shape index: {}]
  %s3 = sld [smem:[#allocation0]]
  $region26: #{combo_loss.2} parent=0
    _
  %s5 = ssub.s32 1, %s3
  %s6 = scalar_select 0, %s5, %s3
  // Predicated region
  $region2: #{combo_loss.2} parent=0 // pred_check
    _
  $region3: #{combo_loss.2} parent=0 // pred_check_branch
    %8 = sbr.rel (0) target = $region5
  $region4: #{combo_loss.2} parent=0 // pred_region
    _
  $region5: #{combo_loss.2} parent=0 // pred_fallthru
    _
  // Predicated region
  $region6: #{combo_loss.2} parent=0 // pred_check
    _
  $region7: #{combo_loss.2} parent=0 // pred_check_branch
    %10 = sbr.rel (0) target = $region9
  $region8: #{combo_loss.2} parent=0 // pred_region
    _
  $region9: #{combo_loss.2} parent=0 // pred_fallthru
    _
  %p11 = scmp.eq.s32.totalorder 0, 0
  // Predicated region
  $region10: #{combo_loss.2} parent=0 // pred_check
    %p12 = pneg %p11
  $region11: #{combo_loss.2} parent=0 // pred_check_branch
    %14 = sbr.rel (%p12) target = $region13
  $region12: #{combo_loss.2} parent=0 // pred_region
    %15 = vst [vmem:[#allocation2] sm:$0xff] 0.0
  $region13: #{combo_loss.2} parent=0 // pred_fallthru
    _
  %v16 = vld [vmem:[%s0] sm:$0xff]
  %v17 = vld [vmem:[%s1] sm:$0xff]
  %v18 = vlaneseq
  %v19 = vshrl.u32 %v18, 7
  %v20 = vlaneseq
  %v21 = vand.u32 %v20, 127
  %s22 = smul.u32 0, 1024
  %v23 = vmul.u32 %v19, 128
  %v24 = vstv %s22
  %v25 = vadd.s32 %v24, %v23
  %v26 = vadd.s32 %v25, %v21
  %vm27 = vcmp.lt.s32.totalorder %v26, 512
  %v28 = vsub.f32 0.0, %v16
  %v29 = vmul.f32 %v28, 1.442695
  %v30 = vpow.pop %v29
  %v31 = vadd.f32 %v30, 1.0
  %v32 = vrcp.pop %v31
  %v33 = vmul.f32 1.0, %v32
  %v34 = vmax.f32 %v16, 0.0
  %v35 = vmul.f32 %v16, %v17
  %v36 = vsub.f32 %v34, %v35
  %v37 = vand.u32 2147483647, %v16
  %v38 = vsub.f32 0.0, %v37
  %v39 = vmul.f32 %v38, 1.442695
  %v40 = vpow.pop %v39
  %v41 = vadd.f32 %v40, 1.0
  %v42 = vlog2.pop %v41
  %v43 = vmul.f32 %v42, 0.6931472
  %v44 = vadd.f32 %v36, %v43
  %v45 = vmax.f32 %v17, 1e-06
  %v46 = vmin.f32 %v45, 0.999999
  %v47 = vmax.f32 %v33, 1e-06
  %v48 = vmin.f32 %v47, 0.999999
  %v49 = vsub.f32 1.0, %v46
  %v50 = vsub.f32 1.0, %v48
  %v51 = vmul.f32 %v49, %v50
  %v52 = vmul.f32 %v46, %v48
  %v53 = vadd.f32 %v51, %v52
  %v54 = vsub.f32 1.0, %v53
  %v55 = vmul.f32 %v54, %v54
  %v56 = vsub.f32 0.0, %v55
  %v57 = vlog2.pop %v53
  %v58 = vmul.f32 %v57, 0.6931472
  %v59 = vmul.f32 %v56, %v58
  %vm60 = vcmp.ne.f32.partialorder %v17, 255.0
  %vm61 = vmand %vm27, %vm60
  %v62 = vsel %vm27, %v44, 0.0
  %v63 = vrot.slane %v62, 4
  %v64 = vadd.f32 %v62, %v63
  %v65 = vrot.slane %v64, 2
  %v66 = vadd.f32 %v64, %v65
  %v67 = vrot.slane %v66, 1
  %v68 = vadd.f32 %v66, %v67
  %v69 = vsel %vm27, %v33, 0.0
  %v70 = vrot.slane %v69, 4
  %v71 = vadd.f32 %v69, %v70
  %v72 = vrot.slane %v71, 2
  %v73 = vadd.f32 %v71, %v72
  %v74 = vrot.slane %v73, 1
  %v75 = vadd.f32 %v73, %v74
  %v76 = vsel %vm27, %v17, 0.0
  %v77 = vrot.slane %v76, 4
  %v78 = vadd.f32 %v76, %v77
  %v79 = vrot.slane %v78, 2
  %v80 = vadd.f32 %v78, %v79
  %v81 = vrot.slane %v80, 1
  %v82 = vadd.f32 %v80, %v81
  %v83 = vmul.f32 %v33, %v17
  %v84 = vsel %vm27, %v83, 0.0
  %v85 = vrot.slane %v84, 4
  %v86 = vadd.f32 %v84, %v85
  %v87 = vrot.slane %v86, 2
  %v88 = vadd.f32 %v86, %v87
  %v89 = vrot.slane %v88, 1
  %v90 = vadd.f32 %v88, %v89
  %v91 = vsel %vm61, %v59, 0.0
  %v92 = vrot.slane %v91, 4
  %v93 = vadd.f32 %v91, %v92
  %v94 = vrot.slane %v93, 2
  %v95 = vadd.f32 %v93, %v94
  %v96 = vrot.slane %v95, 1
  %v97 = vadd.f32 %v95, %v96
  %v98 = vsel %vm61, 1.0, 0.0
  %v99 = vrot.slane %v98, 4
  %v100 = vadd.f32 %v98, %v99
  %v101 = vrot.slane %v100, 2
  %v102 = vadd.f32 %v100, %v101
  %v103 = vrot.slane %v102, 1
  %v104 = vadd.f32 %v102, %v103
  %vm105 = vcmask 1040384
  %v106 = vsel %vm105, %v68, %v75
  %vm107 = vcmask 1041408
  %v108 = vsel %vm107, %v106, %v82
  %vm109 = vcmask 1042432
  %v110 = vsel %vm109, %v108, %v90
  %vm111 = vcmask 1043456
  %v112 = vsel %vm111, %v110, %v97
  %vm113 = vcmask 1044480
  %v114 = vsel %vm113, %v112, %v104
  %vm115 = vcmask 1045504
  %v116 = vsel %vm115, %v114, 0.0
  %v117 = vld [vmem:[#allocation2] sm:$0xff]
  %v118 = vadd.f32 %v117, %v116
  %119 = vst [vmem:[#allocation2] sm:$0xff] %v118
  // Predicated region
  $region14: #{combo_loss.2} parent=0 // pred_check
    %p120 = pneg %p11
  $region15: #{combo_loss.2} parent=0 // pred_check_branch
    %122 = sbr.rel (%p120) target = $region17
  $region16: #{combo_loss.2} parent=0 // pred_region
    %v123 = vld [vmem:[#allocation2] sm:$0xff]
    %124 = vst [vmem:[%s2] sm:$0xff] %v123
  $region17: #{combo_loss.2} parent=0 // pred_fallthru
    _
  // Predicated region
  $region18: #{combo_loss.2} parent=0 // pred_check
    _
  $region19: #{combo_loss.2} parent=0 // pred_check_branch
    %126 = sbr.rel (0) target = $region21
  $region20: #{combo_loss.2} parent=0 // pred_region
    _
  $region21: #{combo_loss.2} parent=0 // pred_fallthru
    _
  // Predicated region
  $region22: #{combo_loss.2} parent=0 // pred_check
    _
  $region23: #{combo_loss.2} parent=0 // pred_check_branch
    %128 = sbr.rel (0) target = $region25
  $region24: #{combo_loss.2} parent=0 // pred_region
    _
  $region25: #{combo_loss.2} parent=0 // pred_fallthru
    _

// kernel: combo_loss.3
$region0: #{combo_loss.3}
  #allocation0 [shape = 'u32[]', space=smem, size = 0x4, offset = 0x4, fixed_abs, tag = 'smem constant byte address 0x4 - core index']
  #allocation1 [shape = 'u32[144,128]{1,0:T(1,128)}', space=vmem, size = 0x12000, scoped, tag = 'internal scratch']
  #allocation2 [shape = 'f32[1,1]{1,0:T(1,128)}', space=vmem, size = 0x200, scoped, tag = 'scratch operand']
  #allocation3 [shape = 'f32[1,1]{1,0:T(1,128)}', space=vmem, size = 0x200, scoped, tag = 'scratch operand']
  %s0 = inlined_call_operand.vmem [shape: f32[128,128], index: 0, kind: input, shape index: {}]
  %s1 = inlined_call_operand.vmem [shape: f32[8,8], index: 1, kind: input, shape index: {}]
  %s2 = inlined_call_operand.vmem [shape: f32[4,1,1], index: 2, kind: input, shape index: {}]
  %s3 = inlined_call_operand.vmem [shape: f32[4,8,128], index: 3, kind: input, shape index: {}]
  %s4 = inlined_call_operand.vmem [shape: f32[4,8,128], index: 4, kind: input, shape index: {}]
  %s5 = inlined_call_operand.vmem [shape: f32[4,1,1], index: 5, kind: output, shape index: {}]
  %s6 = sld [smem:[#allocation0]]
  $region61: #{combo_loss.3} parent=0
    _
  %s8 = ssub.s32 1, %s6
  %s9 = scalar_select 0, %s8, %s6
  loop: start=0, step=1, limit=6
  $region2: #{combo_loss.3} parent=0 // loop_pre_header
    _
  $region3: #{combo_loss.3} parent=0 // loop_header
    %s11 = sphi 0, %s15
    %p12 = scmp.ge.s32.totalorder %s11, 6
    %s18 = sphi 0, %s30
    %s19 = sphi 0, %s26
    %s20 = sphi 0, %s18
    %s21 = sphi 0, %s19
    %s22 = sphi 0, %s20
    %s23 = sphi 0, %s21
    %s31 = sphi 0, %s31
    %s33 = sphi 0, %s31
    %s34 = sphi 0, %s33
    %s48 = sphi 0, %s34
    %s52 = sphi 0, %s52
    %s54 = sphi 0, %s52
    %s55 = sphi 0, %s54
    %s69 = sphi 0, %s55
    %s75 = sphi 0, %s77
    %s78 = sphi 0, %s75
    %s79 = sphi 0, %s78
    %s95 = sphi 0, %s79
    %s103 = sphi 0, %s105
    %s106 = sphi 0, %s103
    %s107 = sphi 0, %s106
    %s123 = sphi 0, %s107
    %s131 = sphi 0, %s133
    %s134 = sphi 0, %s131
    %s135 = sphi 0, %s134
    %s151 = sphi 0, %s135
    %s157 = sphi 0, %s159
    %s160 = sphi 0, %s157
    %s161 = sphi 0, %s160
    %s177 = sphi 0, %s161
  $region4: #{combo_loss.3} parent=0 // loop_header_branch
    %14 = sbr.rel (%p12) target = $region8
  $region5: #{combo_loss.3} parent=0 // loop_body
    %s16 = ssub.s32 %s11, 1
    %s17 = ssub.s32 %s11, 2
    %s24 = sadd.s32 1, %s19
    %p25 = scmp.ge.s32.totalorder %s24, 1
    %s26 = scalar_select %p25, 0, %s24
    %s27 = sadd.s32 1, %s18
    %s28 = scalar_select %p25, %s27, %s18
    %p29 = scmp.ge.s32.totalorder %s28, 4
    %s30 = scalar_select %p29, 0, %s28
    %s32 = sadd.s32 %s31, 1
    %p35 = scmp.eq.s32.totalorder %s11, 3
    %p36 = scmp.ne.s32.totalorder %s31, %s33
    %p37 = scmp.eq.s32.totalorder %s11, 0
    %p38 = por %p36, %p37
    %p39 = scmp.ne.s32.totalorder %s31, %s33
    %p40 = scmp.eq.s32.totalorder %s16, 3
    %p41 = por %p39, %p40
    %p42 = scmp.ne.s32.totalorder %s33, %s34
    %p43 = scmp.eq.s32.totalorder %s16, 0
    %p44 = por %p42, %p43
    %p45 = scmp.ne.s32.totalorder %s33, %s34
    %p46 = scmp.eq.s32.totalorder %s17, 3
    %p47 = por %p45, %p46
    %p49 = scmp.ne.s32.totalorder %s34, %s48
    %p50 = scmp.eq.s32.totalorder %s17, 0
    %p51 = por %p49, %p50
    %s53 = sadd.s32 %s52, 1
    %p56 = scmp.eq.s32.totalorder %s11, 3
    %p57 = scmp.ne.s32.totalorder %s52, %s54
    %p58 = scmp.eq.s32.totalorder %s11, 0
    %p59 = por %p57, %p58
    %p60 = scmp.ne.s32.totalorder %s52, %s54
    %p61 = scmp.eq.s32.totalorder %s16, 3
    %p62 = por %p60, %p61
    %p63 = scmp.ne.s32.totalorder %s54, %s55
    %p64 = scmp.eq.s32.totalorder %s16, 0
    %p65 = por %p63, %p64
    %p66 = scmp.ne.s32.totalorder %s54, %s55
    %p67 = scmp.eq.s32.totalorder %s17, 3
    %p68 = por %p66, %p67
    %p70 = scmp.ne.s32.totalorder %s55, %s69
    %p71 = scmp.eq.s32.totalorder %s17, 0
    %p72 = por %p70, %p71
    %s73 = ssub.s32 %s18, %s30
    %p74 = scmp.eq.s32.totalorder %s73, 0
    %s76 = sadd.s32 %s75, 1
    %s77 = scalar_select %p74, %s75, %s76
    %p80 = pneg %p74
    %p81 = scmp.eq.s32.totalorder %s11, 3
    %p82 = por %p80, %p81
    %p83 = scmp.ne.s32.totalorder %s75, %s78
    %p84 = scmp.eq.s32.totalorder %s11, 0
    %p85 = por %p83, %p84
    %p86 = scmp.ne.s32.totalorder %s75, %s78
    %p87 = scmp.eq.s32.totalorder %s16, 3
    %p88 = por %p86, %p87
    %p89 = scmp.ne.s32.totalorder %s78, %s79
    %p90 = scmp.eq.s32.totalorder %s16, 0
    %p91 = por %p89, %p90
    %p92 = scmp.ne.s32.totalorder %s78, %s79
    %p93 = scmp.eq.s32.totalorder %s17, 3
    %p94 = por %p92, %p93
    %p96 = scmp.ne.s32.totalorder %s79, %s95
    %p97 = scmp.eq.s32.totalorder %s17, 0
    %p98 = por %p96, %p97
    %s99 = ssub.s32 %s18, %s30
    %s100 = ssub.s32 %s19, %s26
    %s101 = sor.u32 %s99, %s100
    %p102 = scmp.eq.s32.totalorder %s101, 0
    %s104 = sadd.s32 %s103, 1
    %s105 = scalar_select %p102, %s103, %s104
    %p108 = pneg %p102
    %p109 = scmp.eq.s32.totalorder %s11, 3
    %p110 = por %p108, %p109
    %p111 = scmp.ne.s32.totalorder %s103, %s106
    %p112 = scmp.eq.s32.totalorder %s11, 0
    %p113 = por %p111, %p112
    %p114 = scmp.ne.s32.totalorder %s103, %s106
    %p115 = scmp.eq.s32.totalorder %s16, 3
    %p116 = por %p114, %p115
    %p117 = scmp.ne.s32.totalorder %s106, %s107
    %p118 = scmp.eq.s32.totalorder %s16, 0
    %p119 = por %p117, %p118
    %p120 = scmp.ne.s32.totalorder %s106, %s107
    %p121 = scmp.eq.s32.totalorder %s17, 3
    %p122 = por %p120, %p121
    %p124 = scmp.ne.s32.totalorder %s107, %s123
    %p125 = scmp.eq.s32.totalorder %s17, 0
    %p126 = por %p124, %p125
    %s127 = ssub.s32 %s18, %s30
    %s128 = ssub.s32 %s19, %s26
    %s129 = sor.u32 %s127, %s128
    %p130 = scmp.eq.s32.totalorder %s129, 0
    %s132 = sadd.s32 %s131, 1
    %s133 = scalar_select %p130, %s131, %s132
    %p136 = pneg %p130
    %p137 = scmp.eq.s32.totalorder %s11, 3
    %p138 = por %p136, %p137
    %p139 = scmp.ne.s32.totalorder %s131, %s134
    %p140 = scmp.eq.s32.totalorder %s11, 0
    %p141 = por %p139, %p140
    %p142 = scmp.ne.s32.totalorder %s131, %s134
    %p143 = scmp.eq.s32.totalorder %s16, 3
    %p144 = por %p142, %p143
    %p145 = scmp.ne.s32.totalorder %s134, %s135
    %p146 = scmp.eq.s32.totalorder %s16, 0
    %p147 = por %p145, %p146
    %p148 = scmp.ne.s32.totalorder %s134, %s135
    %p149 = scmp.eq.s32.totalorder %s17, 3
    %p150 = por %p148, %p149
    %p152 = scmp.ne.s32.totalorder %s135, %s151
    %p153 = scmp.eq.s32.totalorder %s17, 0
    %p154 = por %p152, %p153
    %s155 = ssub.s32 %s18, %s30
    %p156 = scmp.eq.s32.totalorder %s155, 0
    %s158 = sadd.s32 %s157, 1
    %s159 = scalar_select %p156, %s157, %s158
    %p162 = pneg %p156
    %p163 = scmp.eq.s32.totalorder %s11, 3
    %p164 = por %p162, %p163
    %p165 = scmp.ne.s32.totalorder %s157, %s160
    %p166 = scmp.eq.s32.totalorder %s11, 0
    %p167 = por %p165, %p166
    %p168 = scmp.ne.s32.totalorder %s157, %s160
    %p169 = scmp.eq.s32.totalorder %s16, 3
    %p170 = por %p168, %p169
    %p171 = scmp.ne.s32.totalorder %s160, %s161
    %p172 = scmp.eq.s32.totalorder %s16, 0
    %p173 = por %p171, %p172
    %p174 = scmp.ne.s32.totalorder %s160, %s161
    %p175 = scmp.eq.s32.totalorder %s17, 3
    %p176 = por %p174, %p175
    %p178 = scmp.ne.s32.totalorder %s161, %s177
    %p179 = scmp.eq.s32.totalorder %s17, 0
    %p180 = por %p178, %p179
    %p181 = scmp.le.s32.totalorder 1, %s11
    %p182 = scmp.lt.s32.totalorder %s11, 5
    %p183 = pnand %p181, %p182
    %p184 = pneg %p183
    // Predicated region
    $region9: #{combo_loss.3} parent=5 // pred_check
      _
    $region10: #{combo_loss.3} parent=5 // pred_check_branch
      %186 = sbr.rel (%p183) target = $region12
    $region11: #{combo_loss.3} parent=5 // pred_region
      %s187 = ssub.s32 %s11, 1
      // Predicated region
      $region13: #{combo_loss.3} parent=11 // pred_check
        %p188 = pneg %p44
      $region14: #{combo_loss.3} parent=11 // pred_check_branch
        %190 = sbr.rel (%p188) target = $region16
      $region15: #{combo_loss.3} parent=11 // pred_region
        _
      $region16: #{combo_loss.3} parent=11 // pred_fallthru
        _
      // Predicated region
      $region17: #{combo_loss.3} parent=11 // pred_check
        %p191 = pneg %p65
      $region18: #{combo_loss.3} parent=11 // pred_check_branch
        %193 = sbr.rel (%p191) target = $region20
      $region19: #{combo_loss.3} parent=11 // pred_region
        _
      $region20: #{combo_loss.3} parent=11 // pred_fallthru
        _
    $region12: #{combo_loss.3} parent=5 // pred_fallthru
      _
    %p194 = scmp.lt.s32.totalorder %s11, 4
    // Predicated region
    $region21: #{combo_loss.3} parent=5 // pred_check
      %p195 = pneg %p194
    $region22: #{combo_loss.3} parent=5 // pred_check_branch
      %197 = sbr.rel (%p195) target = $region24
    $region23: #{combo_loss.3} parent=5 // pred_region
      // Predicated region
      $region25: #{combo_loss.3} parent=23 // pred_check
        %p198 = pneg %p85
      $region26: #{combo_loss.3} parent=23 // pred_check_branch
        %200 = sbr.rel (%p198) target = $region28
      $region27: #{combo_loss.3} parent=23 // pred_region
        %p201 = scmp.lt.s32.totalorder %s18, 3
        %s202 = scalar_select %p201, %s18, 3
        %s203 = scalar_lea.vmem %s2, %s202
      $region28: #{combo_loss.3} parent=23 // pred_fallthru
        _
      // Predicated region
      $region29: #{combo_loss.3} parent=23 // pred_check
        %p204 = pneg %p113
      $region30: #{combo_loss.3} parent=23 // pred_check_branch
        %206 = sbr.rel (%p204) target = $region32
      $region31: #{combo_loss.3} parent=23 // pred_region
        %p207 = scmp.lt.s32.totalorder %s18, 3
        %s208 = scalar_select %p207, %s18, 3
        %p209 = scmp.lt.s32.totalorder %s19, 0
        %s210 = scalar_select %p209, %s19, 0
        %s211 = sadd.s32 %s210, %s208
        %s212 = smul.addr %s211, 8
        %s213 = scalar_lea.vmem %s3, %s212
      $region32: #{combo_loss.3} parent=23 // pred_fallthru
        _
      // Predicated region
      $region33: #{combo_loss.3} parent=23 // pred_check
        %p214 = pneg %p141
      $region34: #{combo_loss.3} parent=23 // pred_check_branch
        %216 = sbr.rel (%p214) target = $region36
      $region35: #{combo_loss.3} parent=23 // pred_region
        %p217 = scmp.lt.s32.totalorder %s18, 3
        %s218 = scalar_select %p217, %s18, 3
        %p219 = scmp.lt.s32.totalorder %s19, 0
        %s220 = scalar_select %p219, %s19, 0
        %s221 = sadd.s32 %s220, %s218
        %s222 = smul.addr %s221, 8
        %s223 = scalar_lea.vmem %s4, %s222
      $region36: #{combo_loss.3} parent=23 // pred_fallthru
        _
    $region24: #{combo_loss.3} parent=5 // pred_fallthru
      _
    %p224 = scmp.le.s32.totalorder 1, %s11
    %p225 = scmp.lt.s32.totalorder %s11, 5
    %p226 = pnand %p224, %p225
    %p227 = pneg %p226
    // Predicated region
    $region37: #{combo_loss.3} parent=5 // pred_check
      _
    $region38: #{combo_loss.3} parent=5 // pred_check_branch
      %229 = sbr.rel (%p226) target = $region40
    $region39: #{combo_loss.3} parent=5 // pred_region
      %s230 = ssub.s32 %s11, 1
      %p231 = pneg %p44
      %p232 = pneg %p41
      %p233 = pneg %p65
      %p234 = pneg %p62
      %p235 = scmp.lt.s32.totalorder %s20, 3
      %s236 = scalar_select %p235, %s20, 3
      %s237 = scalar_lea.vmem %s2, %s236
      %p238 = pneg %p91
      %p239 = pneg %p88
      %p240 = scmp.lt.s32.totalorder %s20, 3
      %s241 = scalar_select %p240, %s20, 3
      %p242 = scmp.lt.s32.totalorder %s21, 0
      %s243 = scalar_select %p242, %s21, 0
      %s244 = sadd.s32 %s243, %s241
      %s245 = smul.addr %s244, 8
      %s246 = scalar_lea.vmem %s3, %s245
      %p247 = pneg %p119
      %p248 = pneg %p116
      %p249 = scmp.lt.s32.totalorder %s20, 3
      %s250 = scalar_select %p249, %s20, 3
      %p251 = scmp.lt.s32.totalorder %s21, 0
      %s252 = scalar_select %p251, %s21, 0
      %s253 = sadd.s32 %s252, %s250
      %s254 = smul.addr %s253, 8
      %s255 = scalar_lea.vmem %s4, %s254
      %p256 = pneg %p147
      %p257 = pneg %p144
      %p258 = pneg %p173
      %p259 = pneg %p170
      %p260 = scmp.lt.s32.totalorder %s20, 3
      %s261 = scalar_select %p260, %s20, 3
      %s262 = scalar_lea.vmem %s5, %s261
      %p263 = scmp.lt.s32.totalorder %s20, 3
      %s264 = scalar_select %p263, %s20, 3
      %s265 = scalar_lea.vmem %s2, %s264
      %p266 = scmp.lt.s32.totalorder %s20, 3
      %s267 = scalar_select %p266, %s20, 3
      %p268 = scmp.lt.s32.totalorder %s21, 0
      %s269 = scalar_select %p268, %s21, 0
      %s270 = sadd.s32 %s269, %s267
      %s271 = smul.addr %s270, 8
      %s272 = scalar_lea.vmem %s3, %s271
      %p273 = scmp.lt.s32.totalorder %s20, 3
      %s274 = scalar_select %p273, %s20, 3
      %p275 = scmp.lt.s32.totalorder %s21, 0
      %s276 = scalar_select %p275, %s21, 0
      %s277 = sadd.s32 %s276, %s274
      %s278 = smul.addr %s277, 8
      %s279 = scalar_lea.vmem %s4, %s278
      %p280 = scmp.lt.s32.totalorder %s20, 3
      %s281 = scalar_select %p280, %s20, 3
      %s282 = scalar_lea.vmem %s5, %s281
      %p283 = scmp.eq.s32.totalorder %s21, 0
      // Predicated region
      $region41: #{combo_loss.3} parent=39 // pred_check
        %p284 = pneg %p283
      $region42: #{combo_loss.3} parent=39 // pred_check_branch
        %286 = sbr.rel (%p284) target = $region44
      $region43: #{combo_loss.3} parent=39 // pred_region
        %vm287 = vcmask 0
        %288 = vst.msk [vmem:[#allocation2] sm:$0x1] %vm287, 0.0
        %289 = vst.msk [vmem:[#allocation3] sm:$0x1] %vm287, 0.0
      $region44: #{combo_loss.3} parent=39 // pred_fallthru
        _
      %v290 = vld [vmem:[%s272] sm:$0xff]
      %v291 = vld [vmem:[%s279] sm:$0xff]
      %v292 = vld [vmem:[%s0] sm:$0xff]
      %v293 = vld [vmem:[%s0 + $0x8] sm:$0xff]
      %v294 = vld [vmem:[%s0 + $0x10] sm:$0xff]
      %v295 = vld [vmem:[%s0 + $0x18] sm:$0xff]
      %v296 = vld [vmem:[%s0 + $0x20] sm:$0xff]
      %v297 = vld [vmem:[%s0 + $0x28] sm:$0xff]
      %v298 = vld [vmem:[%s0 + $0x30] sm:$0xff]
      %v299 = vld [vmem:[%s0 + $0x38] sm:$0xff]
      %v300 = vld [vmem:[%s0 + $0x40] sm:$0xff]
      %v301 = vld [vmem:[%s0 + $0x48] sm:$0xff]
      %v302 = vld [vmem:[%s0 + $0x50] sm:$0xff]
      %v303 = vld [vmem:[%s0 + $0x58] sm:$0xff]
      %v304 = vld [vmem:[%s0 + $0x60] sm:$0xff]
      %v305 = vld [vmem:[%s0 + $0x68] sm:$0xff]
      %v306 = vld [vmem:[%s0 + $0x70] sm:$0xff]
      %v307 = vld [vmem:[%s0 + $0x78] sm:$0xff]
      %v308 = vld [vmem:[%s1] sm:$0xff]
      %v309 = vld [vmem:[%s265] sm:$0x1]
      %v310 = vld [vmem:[#allocation3] sm:$0x1]
      %vm311 = vcmask 64512
      %v313 = vsel %vm311, %v308, 0
      %315 = vmatprep.subr.mxu0 0.0
      %316 = vmatpush1.msra.mxu0 %v291
      %317 = vmatprep.subr.mxu0 0.0
      %318 = vmatpush1.msra.mxu0 0.0
      %319 = vmatprep.subr.mxu0 0.0
      %320 = vmatpush1.msra.mxu0 0.0
      %321 = vmatprep.subr.mxu0 0.0
      %322 = vmatpush1.msra.mxu0 0.0
      %323 = vmatprep.subr.mxu0 0.0
      %324 = vmatpush1.msra.mxu0 0.0
      %325 = vmatprep.subr.mxu0 0.0
      %326 = vmatpush1.msra.mxu0 0.0
      %327 = vmatprep.subr.mxu0 0.0
      %328 = vmatpush1.msra.mxu0 0.0
      %329 = vmatprep.subr.mxu0 0.0
      %330 = vmatpush1.msra.mxu0 0.0
      %331 = vmatprep.subr.mxu0 0.0
      %332 = vmatpush1.msra.mxu0 0.0
      %333 = vmatprep.subr.mxu0 0.0
      %334 = vmatpush1.msra.mxu0 0.0
      %335 = vmatprep.subr.mxu0 0.0
      %336 = vmatpush1.msra.mxu0 0.0
      %337 = vmatprep.subr.mxu0 0.0
      %338 = vmatpush1.msra.mxu0 0.0
      %339 = vmatprep.subr.mxu0 0.0
      %340 = vmatpush1.msra.mxu0 0.0
      %341 = vmatprep.subr.mxu0 0.0
      %342 = vmatpush1.msra.mxu0 0.0
      %343 = vmatprep.subr.mxu0 0.0
      %344 = vmatpush1.msra.mxu0 0.0
      %345 = vmatprep.subr.mxu0 0.0
      %346 = vmatpush1.msra.mxu0 0.0
      %347 = vmatprep.subr.mxu0 0.0
      %348 = vmatpush1.msra.mxu0 0.0
      %349 = vmatprep.subr.mxu0 0.0
      %350 = vmatpush1.msra.mxu0 0.0
      %351 = vmatprep.subr.mxu0 0.0
      %352 = vmatpush1.msra.mxu0 0.0
      %353 = vmatprep.subr.mxu0 0.0
      %354 = vmatpush1.msra.mxu0 0.0
      %355 = vmatprep.subr.mxu0 0.0
      %356 = vmatpush1.msra.mxu0 0.0
      %357 = vmatprep.subr.mxu0 0.0
      %358 = vmatpush1.msra.mxu0 0.0
      %359 = vmatprep.subr.mxu0 0.0
      %360 = vmatpush1.msra.mxu0 0.0
      %361 = vmatprep.subr.mxu0 0.0
      %362 = vmatpush1.msra.mxu0 0.0
      %363 = vmatprep.subr.mxu0 0.0
      %364 = vmatpush1.msra.mxu0 0.0
      %365 = vmatprep.subr.mxu0 0.0
      %366 = vmatpush1.msra.mxu0 0.0
      %367 = vmatprep.subr.mxu0 0.0
      %368 = vmatpush1.msra.mxu0 0.0
      %369 = vmatprep.subr.mxu0 0.0
      %370 = vmatpush1.msra.mxu0 0.0
      %371 = vmatprep.subr.mxu0 0.0
      %372 = vmatpush1.msra.mxu0 0.0
      %373 = vmatprep.subr.mxu0 0.0
      %374 = vmatpush1.msra.mxu0 0.0
      %375 = vmatprep.subr.mxu0 0.0
      %376 = vmatpush1.msra.mxu0 0.0
      %377 = vmatprep.subr.mxu0 0.0
      %378 = vmatpush1.msra.mxu0 0.0
      %379 = vmatprep.mubr.f32.mxu0 0.0
      %380 = vmatmul.mubr.f32.gmra.mrb[0].mxu0 %v313
      %v381 = vpop.f32.mrb[0].mxu0
      %v382 = vadd.f32 0.0, %v381
      %v383 = vpop.f32.mrb[0].mxu0
      %384 = vdwg.mxu0
      %385 = vadd.xlane.f32.xlu0 %v382
      %v386 = vpop.xlane.xlu0 %385
      %387 = vmatprep.subr.mxu0 0.0
      %388 = vmatpush1.msra.mxu0 %v292
      %389 = vmatprep.subr.mxu0 0.0
      %390 = vmatpush1.msra.mxu0 %v293
      %391 = vmatprep.subr.mxu0 0.0
      %392 = vmatpush1.msra.mxu0 %v294
      %393 = vmatprep.subr.mxu0 0.0
      %394 = vmatpush1.msra.mxu0 %v295
      %395 = vmatprep.subr.mxu0 0.0
      %396 = vmatpush1.msra.mxu0 %v296
      %397 = vmatprep.subr.mxu0 0.0
      %398 = vmatpush1.msra.mxu0 %v297
      %399 = vmatprep.subr.mxu0 0.0
      %400 = vmatpush1.msra.mxu0 %v298
      %401 = vmatprep.subr.mxu0 0.0
      %402 = vmatpush1.msra.mxu0 %v299
      %403 = vmatprep.subr.mxu0 0.0
      %404 = vmatpush1.msra.mxu0 %v300
      %405 = vmatprep.subr.mxu0 0.0
      %406 = vmatpush1.msra.mxu0 %v301
      %407 = vmatprep.subr.mxu0 0.0
      %408 = vmatpush1.msra.mxu0 %v302
      %409 = vmatprep.subr.mxu0 0.0
      %410 = vmatpush1.msra.mxu0 %v303
      %411 = vmatprep.subr.mxu0 0.0
      %412 = vmatpush1.msra.mxu0 %v304
      %413 = vmatprep.subr.mxu0 0.0
      %414 = vmatpush1.msra.mxu0 %v305
      %415 = vmatprep.subr.mxu0 0.0
      %416 = vmatpush1.msra.mxu0 %v306
      %417 = vmatprep.subr.mxu0 0.0
      %418 = vmatpush1.msra.mxu0 %v307
      %419 = vmatprep.subr.mxu0 0.0
      %420 = vmatpush1.msra.mxu0 0.0
      %421 = vmatprep.subr.mxu0 0.0
      %422 = vmatpush1.msra.mxu0 0.0
      %423 = vmatprep.subr.mxu0 0.0
      %424 = vmatpush1.msra.mxu0 0.0
      %425 = vmatprep.subr.mxu0 0.0
      %426 = vmatpush1.msra.mxu0 0.0
      %427 = vmatprep.subr.mxu0 0.0
      %428 = vmatpush1.msra.mxu0 0.0
      %429 = vmatprep.subr.mxu0 0.0
      %430 = vmatpush1.msra.mxu0 0.0
      %431 = vmatprep.subr.mxu0 0.0
      %432 = vmatpush1.msra.mxu0 0.0
      %433 = vmatprep.subr.mxu0 0.0
      %434 = vmatpush1.msra.mxu0 0.0
      %435 = vmatprep.subr.mxu0 0.0
      %436 = vmatpush1.msra.mxu0 0.0
      %437 = vmatprep.subr.mxu0 0.0
      %438 = vmatpush1.msra.mxu0 0.0
      %439 = vmatprep.subr.mxu0 0.0
      %440 = vmatpush1.msra.mxu0 0.0
      %441 = vmatprep.subr.mxu0 0.0
      %442 = vmatpush1.msra.mxu0 0.0
      %443 = vmatprep.subr.mxu0 0.0
      %444 = vmatpush1.msra.mxu0 0.0
      %445 = vmatprep.subr.mxu0 0.0
      %446 = vmatpush1.msra.mxu0 0.0
      %447 = vmatprep.subr.mxu0 0.0
      %448 = vmatpush1.msra.mxu0 0.0
      %449 = vmatprep.subr.mxu0 0.0
      %450 = vmatpush1.msra.mxu0 0.0
      %451 = vmatprep.mubr.f32.mxu0 0.0
      %452 = vmatmul.mubr.f32.gmra.mrb[0].mxu0 %v291
      %v453 = vpop.f32.mrb[0].mxu0
      %v454 = vadd.f32 %v386, %v453
      %v455 = vpop.f32.mrb[0].mxu0
      %456 = vdwg.mxu0
      %v458 = vlaneseq
      %v459 = vshrl.u32 %v458, 7
      %v460 = vsub.s32 0, %v459
      %v461 = vrot.slane %v310, %v460
      %462 = vset.pattern.permute.xlu0 0
      %463 = vperm.xlu0 %462, %v461
      %v464 = vpop.permute.xlu0 %463
      %v466 = vadd.f32 %v454, %v464
      %v467 = vlaneseq
      %v468 = vshrl.u32 %v467, 7
      %v469 = vlaneseq
      %v470 = vand.u32 %v469, 127
      %s471 = smul.u32 %s21, 1024
      %v472 = vmul.u32 %v468, 128
      %v473 = vstv %s471
      %v474 = vadd.s32 %v473, %v472
      %v475 = vadd.s32 %v474, %v470
      %v476 = vadd.s32 %v475, 1
      %v477 = vcvt.s32.f32 %v476
      %v478 = vsub.f32 %v477, %v466
      %v480 = vlaneseq
      %v481 = vshrl.u32 %v480, 7
      %v482 = vsub.s32 0, %v481
      %v483 = vrot.slane %v309, %v482
      %484 = vset.pattern.permute.xlu0 0
      %485 = vperm.xlu0 %484, %v483
      %v486 = vpop.permute.xlu0 %485
      %v488 = vadd.f32 %v486, %v478
      %v489 = vsub.f32 %v486, %v466
      %v490 = vrcp.pop %v488
      %v491 = vmul.f32 %v489, %v490
      %v492 = vsub.f32 1.0, %v491
      %v493 = vsub.f32 %v466, %v291
      %v494 = vsub.f32 %v477, 1.0
      %v495 = vadd.f32 %v486, %v494
      %v496 = vsub.f32 %v495, %v493
      %vm497 = vcmp.eq.f32.partialorder %v496, 0.0
      %v498 = vsel %vm497, 1.0, %v496
      %v499 = vsub.f32 %v486, %v493
      %v500 = vrcp.pop %v498
      %v501 = vmul.f32 %v499, %v500
      %v502 = vsub.f32 1.0, %v501
      %vm503 = vcmp.eq.s32.totalorder %v475, 0
      %v504 = vsel %vm503, 0.0, %v502
      %v505 = vsub.f32 %v492, %v504
      %v506 = vld [vmem:[#allocation2] sm:$0x1]
      %v507 = vmax.f32 %v290, 0.0
      %v508 = vmul.f32 %v507, %v505
      %509 = vadd.xlane.f32.xlu0 %v508
      %v510 = vpop.xlane.xlu0 %509
      %v511 = vrot.slane %v510, 4
      %v512 = vadd.f32 %v510, %v511
      %v513 = vrot.slane %v512, 2
      %v514 = vadd.f32 %v512, %v513
      %v515 = vrot.slane %v514, 1
      %v516 = vadd.f32 %v514, %v515
      %s517 = vtos %v516
      %v518 = vstv %s517
      %v519 = vadd.f32 %v506, %v518
      %vm520 = vcmask 0
      %521 = vst.msk [vmem:[#allocation2] sm:$0x1] %vm520, %v519
      %522 = vadd.xlane.f32.xlu0 %v291
      %v523 = vpop.xlane.xlu0 %522
      %v524 = vrot.slane %v523, 4
      %v525 = vadd.f32 %v523, %v524
      %v526 = vrot.slane %v525, 2
      %v527 = vadd.f32 %v525, %v526
      %v528 = vrot.slane %v527, 1
      %v529 = vadd.f32 %v527, %v528
      %s530 = vtos %v529
      %v531 = vstv %s530
      %v532 = vadd.f32 %v310, %v531
      %533 = vst.msk [vmem:[#allocation3] sm:$0x1] %vm520, %v532
      // Predicated region
      $region45: #{combo_loss.3} parent=39 // pred_check
        %p534 = pneg %p283
      $region46: #{combo_loss.3} parent=39 // pred_check_branch
        %536 = sbr.rel (%p534) target = $region48
      $region47: #{combo_loss.3} parent=39 // pred_region
        %v537 = vld [vmem:[#allocation2] sm:$0x1]
        %538 = vst.msk [vmem:[%s282] sm:$0x1] %vm520, %v537
      $region48: #{combo_loss.3} parent=39 // pred_fallthru
        _
      %p539 = scmp.lt.s32.totalorder %s20, 3
      %s540 = scalar_select %p539, %s20, 3
      %s541 = scalar_lea.vmem %s5, %s540
      // Predicated region
      $region49: #{combo_loss.3} parent=39 // pred_check
        %p542 = pneg %p170
      $region50: #{combo_loss.3} parent=39 // pred_check_branch
        %544 = sbr.rel (%p542) target = $region52
      $region51: #{combo_loss.3} parent=39 // pred_region
        _
      $region52: #{combo_loss.3} parent=39 // pred_fallthru
        _
    $region40: #{combo_loss.3} parent=5 // pred_fallthru
      _
    %p545 = scmp.le.s32.totalorder 2, %s11
    // Predicated region
    $region53: #{combo_loss.3} parent=5 // pred_check
      %p546 = pneg %p545
    $region54: #{combo_loss.3} parent=5 // pred_check_branch
      %548 = sbr.rel (%p546) target = $region56
    $region55: #{combo_loss.3} parent=5 // pred_region
      %s549 = ssub.s32 %s11, 2
      // Predicated region
      $region57: #{combo_loss.3} parent=55 // pred_check
        %p550 = pneg %p176
      $region58: #{combo_loss.3} parent=55 // pred_check_branch
        %552 = sbr.rel (%p550) target = $region60
      $region59: #{combo_loss.3} parent=55 // pred_region
        %p553 = scmp.lt.s32.totalorder %s22, 3
        %s554 = scalar_select %p553, %s22, 3
        %s555 = scalar_lea.vmem %s5, %s554
      $region60: #{combo_loss.3} parent=55 // pred_fallthru
        _
    $region56: #{combo_loss.3} parent=5 // pred_fallthru
      _
  $region6: #{combo_loss.3} parent=0 // loop_footer
    %s15 = sadd.s32 1, %s11
  $region7: #{combo_loss.3} parent=0 // loop_footer_branch
    %10 = sbr.rel target = $region3
  $region8: #{combo_loss.3} parent=0 // loop_exit
    _

</llo_original>
